<compile_context>
chip_gen: v7x
topology: tpu7x:2x2x1
jax: 0.10.0
libtpu: 0.0.40
codegen_flags: <defaults>
</compile_context>

<pallas_src>
import jax
import jax.numpy as jnp
import numpy as np
from jax.experimental import pallas as pl
from jax.experimental.pallas import tpu as pltpu

EPS = 1e-6      # TODO(synk): typedef.EPS value unknown in source repo; assumed 1e-6
BN_EPS = 1e-5   # torch.nn.BatchNorm1d default eps


def res_node_conv_kernel(x_ref, wcat_ref, ea_ref, src_ref, tgt_ref,
                         gamma_ref, beta_ref, out_ref,
                         hlin_scr, xw2aug_scr, acc_scr):
    N, C = x_ref.shape
    CA = acc_scr.shape[1]                 # C+1 padded up to a multiple of 128 lanes
    TE = src_ref.shape[0]
    e_step = pl.program_id(0)

    # ---- step 0: fused projection x @ [W1 | W2] (single bf16 MXU pass), init scratch
    @pl.when(e_step == 0)
    def _init():
        xw = jnp.dot(x_ref[...].astype(jnp.bfloat16), wcat_ref[...],
                     preferred_element_type=jnp.float32)           # [N, 2C] f32
        hlin_scr[...] = xw[:, :C]                                  # h_lin = x @ W1
        # [x@W2 | 1 | 0-pad] in bf16: the ones column makes the scatter matmul
        # also emit the per-node attention-denominator (degree).
        xw2aug_scr[...] = jnp.zeros_like(xw2aug_scr)
        xw2aug_scr[:, :C] = xw[:, C:].astype(jnp.bfloat16)
        xw2aug_scr[:, C:C + 1] = jnp.ones((N, 1), jnp.bfloat16)
        acc_scr[...] = jnp.zeros_like(acc_scr)                     # [agg_raw | deg | pad]

    # ---- per edge-tile: build one-hots in-register from indices, gather, scatter-add
    src_col = src_ref[...]                                         # [TE, 1] int32
    tgt_row = tgt_ref[0]                                           # [1, TE] int32 (lane-dense)
    sig = jax.nn.sigmoid(ea_ref[0])                                # [1, TE] f32 (EUP, lane-dense)

    # Gather one-hot [TE, N]: node id along lanes, edge's src id along sublanes.
    node_iota_en = jax.lax.broadcasted_iota(jnp.int32, (TE, N), 1)
    src_oh = (node_iota_en == src_col).astype(jnp.bfloat16)        # 0/1 exact in bf16
    # Scatter one-hot^T [N, TE] with sigmoid folded in (padded edges have tgt = -1
    # so their columns are all zero and contribute nothing).
    node_iota_ne = jax.lax.broadcasted_iota(jnp.int32, (N, TE), 0)
    tgt_oh_sig = jnp.where(node_iota_ne == tgt_row, sig, 0.0)      # [N, TE] f32

    gathered = jnp.dot(src_oh, xw2aug_scr[...],
                       preferred_element_type=jnp.float32)         # [TE, CA] = [xw2[src] | 1 | 0]
    # f32 scatter matmul keeps message precision (review correctness concern);
    # kept adjacent / acc not read elsewhere so v7x can accumulate in the MRB.
    acc_scr[...] += jnp.dot(tgt_oh_sig, gathered,
                            preferred_element_type=jnp.float32)    # [N, CA] scatter-add

    # ---- last step: normalize by degree, BN (batch stats), ReLU, residual
    @pl.when(e_step == pl.num_programs(0) - 1)
    def _finalize():
        agg_raw = acc_scr[:, :C]                                   # [N, C]
        deg = acc_scr[:, C:C + 1]                                  # [N, 1]
        agg = agg_raw / (deg + EPS)       # divide only after ALL edge tiles accumulated
        h = hlin_scr[...] + agg
        mean = jnp.mean(h, axis=0, keepdims=True)
        var = jnp.mean((h - mean) ** 2, axis=0, keepdims=True)     # biased var (torch BN)
        hn = (h - mean) * jax.lax.rsqrt(var + BN_EPS) * gamma_ref[...] + beta_ref[...]
        out_ref[...] = x_ref[...] + jnp.maximum(hn, 0.0)


def res_node_conv(x, edge_attr, edge_index, w1_t, w2_t, gamma, beta, *, edge_tile=256):
    """x: [N, C] f32, edge_attr: [E, 1] f32, edge_index: [2, E] int32.
    Residual requires in_channels == out_channels (as in the PyTorch module)."""
    N, C = x.shape
    E = edge_attr.shape[0]
    n_et = -(-E // edge_tile)
    E_pad = n_et * edge_tile
    CA = ((C + 1 + 127) // 128) * 128          # augmented width padded to 128 lanes

    src = edge_index[0].astype(jnp.int32)
    tgt = edge_index[1].astype(jnp.int32)

    # Index / edge-attr streams only (O(E) bytes): padded slots use index -1 so the
    # in-kernel one-hot compare never matches them.
    # NOTE: out-of-range indices are silently dropped (PyG would raise).
    src_col = jnp.full((E_pad, 1), -1, jnp.int32).at[:E, 0].set(src)            # [E_pad, 1]
    tgt_row = jnp.full((E_pad,), -1, jnp.int32).at[:E].set(tgt) \
                 .reshape(n_et, 1, edge_tile)                                   # lane-dense
    ea_row = jnp.zeros((E_pad,), jnp.float32).at[:E].set(
        edge_attr.reshape(-1).astype(jnp.float32)).reshape(n_et, 1, edge_tile)  # lane-dense

    wcat = jnp.concatenate([w1_t, w2_t], axis=1).astype(jnp.bfloat16)           # [C, 2C]
    gamma2 = gamma.reshape(1, C).astype(jnp.float32)
    beta2 = beta.reshape(1, C).astype(jnp.float32)

    flops = (2 * N * C * (2 * C)               # fused projection
             + 2 * E_pad * N * CA              # gather matmul
             + 2 * N * E_pad * CA)             # scatter matmul
    bytes_accessed = (x.size * 4 + wcat.size * 2 + E_pad * 4 * 3
                      + (gamma2.size + beta2.size) * 4 + N * C * 4)
    cost = pl.CostEstimate(flops=flops, transcendentals=E_pad + C,
                           bytes_accessed=bytes_accessed)

    # VMEM budget derived from the actual footprint (not a fixed 32 MiB guess).
    vmem_need = (2 * N * C * 4                     # x + out blocks
                 + C * (2 * C) * 2                 # wcat (bf16)
                 + 2 * C * 4                       # gamma, beta
                 + N * C * 4                       # hlin scratch
                 + N * CA * (2 + 4)                # xw2aug (bf16) + acc (f32) scratch
                 + 2 * edge_tile * 128 * 4         # src column blocks (lane-padded), 2 bufs
                 + 2 * 2 * 8 * edge_tile * 4)      # ea + tgt lane-dense rows, 2 bufs
    vmem_limit = int(min(96 << 20, max(2 * vmem_need + (4 << 20), 32 << 20)))

    def full(shape):
        return pl.BlockSpec(shape, lambda e: (0,) * len(shape))

    grid_spec = pltpu.PrefetchScalarGridSpec(
        num_scalar_prefetch=0,
        grid=(n_et,),
        in_specs=[
            full((N, C)),                                            # x
            full((C, 2 * C)),                                        # [W1 | W2] bf16
            pl.BlockSpec((1, 1, edge_tile), lambda e: (e, 0, 0)),    # edge_attr (lane-dense)
            pl.BlockSpec((edge_tile, 1), lambda e: (e, 0)),          # src indices (column)
            pl.BlockSpec((1, 1, edge_tile), lambda e: (e, 0, 0)),    # tgt indices (lane-dense)
            full((1, C)),                                            # BN gamma
            full((1, C)),                                            # BN beta
        ],
        out_specs=full((N, C)),
        scratch_shapes=[
            pltpu.VMEM((N, C), jnp.float32),        # h_lin = x @ W1
            pltpu.VMEM((N, CA), jnp.bfloat16),      # [x @ W2 | 1 | 0-pad]
            pltpu.VMEM((N, CA), jnp.float32),       # [agg_raw | deg | pad] accumulator
        ],
    )

    return pl.pallas_call(
        res_node_conv_kernel,
        out_shape=jax.ShapeDtypeStruct((N, C), jnp.float32),
        grid_spec=grid_spec,
        compiler_params=pltpu.CompilerParams(
            dimension_semantics=("arbitrary",),        # edge axis is a reduction
            vmem_limit_bytes=vmem_limit,
        ),
        cost_estimate=cost,
    )(x, wcat, ea_row, src_col, tgt_row, gamma2, beta2)


def res_node_conv_reference(x, edge_attr, edge_index, w1_t, w2_t, gamma, beta):
    """Pure-JAX reference mirroring the PyTorch module."""
    N, C = x.shape
    src, tgt = edge_index[0], edge_index[1]
    h_lin = x @ w1_t
    sig = jax.nn.sigmoid(edge_attr)
    deg = jnp.zeros((N, 1), jnp.float32).at[tgt].add(sig)
    atten = sig / (deg[tgt] + EPS)
    msg = atten * (x[src] @ w2_t)
    agg = jnp.zeros((N, C), jnp.float32).at[tgt].add(msg)
    h = h_lin + agg
    mean = h.mean(0, keepdims=True)
    var = ((h - mean) ** 2).mean(0, keepdims=True)
    hn = (h - mean) / jnp.sqrt(var + BN_EPS) * gamma.reshape(1, C) + beta.reshape(1, C)
    return x + jnp.maximum(hn, 0.0)


if __name__ == "__main__":
    # Small graph; E > 2*edge_tile so the edge-tile grid runs 3 accumulation steps.
    N, C, E = 16, 32, 600   # in_channels == out_channels (required by residual x + h)

    key = jax.random.PRNGKey(0)
    kx, kea, ksrc, ktgt, kw1, kw2, kg, kb = jax.random.split(key, 8)

    x = jax.random.normal(kx, (N, C), dtype=jnp.float32)
    edge_attr = jax.random.normal(kea, (E, 1), dtype=jnp.float32)
    src = jax.random.randint(ksrc, (E,), 0, N, dtype=jnp.int32)
    tgt = jax.random.randint(ktgt, (E,), 0, N, dtype=jnp.int32)
    edge_index = jnp.stack([src, tgt], axis=0)            # [2, E]

    # torch Linear(bias=False): weight is [out, in]; kernels take weight.T.
    bound = 1.0 / np.sqrt(C)
    w1 = jax.random.uniform(kw1, (C, C), jnp.float32, -bound, bound)  # self.lin.weight
    w2 = jax.random.uniform(kw2, (C, C), jnp.float32, -bound, bound)  # gea.lin.weight
    w1_t, w2_t = w1.T, w2.T
    gamma = 1.0 + 0.1 * jax.random.normal(kg, (C,), jnp.float32)      # BN weight
    beta = 0.1 * jax.random.normal(kb, (C,), jnp.float32)             # BN bias

    out = res_node_conv(x, edge_attr, edge_index, w1_t, w2_t, gamma, beta)
    out = jax.block_until_ready(out)

    ref = res_node_conv_reference(x, edge_attr, edge_index, w1_t, w2_t, gamma, beta)
    # bf16 MXU operands for the projection / gathered messages -> slightly looser tol.
    np.testing.assert_allclose(np.asarray(out), np.asarray(ref), rtol=1e-2, atol=1e-2)

    print("KERNEL_OK")
</pallas_src>

<mosaic_0001>
module attributes {stable_mosaic.version = 11 : i64} {
  func.func @res_node_conv_kernel(%arg0: i32, %arg1: memref<16x32xf32, #tpu.memory_space<vmem>>, %arg2: memref<32x64xbf16, #tpu.memory_space<vmem>>, %arg3: memref<1x1x256xf32, #tpu.memory_space<vmem>>, %arg4: memref<256x1xi32, #tpu.memory_space<vmem>>, %arg5: memref<1x1x256xi32, #tpu.memory_space<vmem>>, %arg6: memref<1x32xf32, #tpu.memory_space<vmem>>, %arg7: memref<1x32xf32, #tpu.memory_space<vmem>>, %arg8: memref<16x32xf32, #tpu.memory_space<vmem>>, %arg9: memref<16x32xf32, #tpu.memory_space<vmem>>, %arg10: memref<16x128xbf16, #tpu.memory_space<vmem>>, %arg11: memref<16x128xf32, #tpu.memory_space<vmem>>) attributes {dimension_semantics = [#tpu.dimension_semantics<arbitrary>], iteration_bounds = array<i64: 3>, scalar_prefetch = 0 : i64, scratch_operands = 3 : i64, tpu.core_type = #tpu.core_type<tc>, window_params = [{pipeline_mode = #tpu.pipeline_mode<synchronous>, transform_indices = @transform_0, window_bounds = array<i64: 16, 32>}, {pipeline_mode = #tpu.pipeline_mode<synchronous>, transform_indices = @transform_1, window_bounds = array<i64: 32, 64>}, {transform_indices = @transform_2, window_bounds = array<i64: 1, 1, 256>}, {transform_indices = @transform_3, window_bounds = array<i64: 256, 1>}, {transform_indices = @transform_4, window_bounds = array<i64: 1, 1, 256>}, {pipeline_mode = #tpu.pipeline_mode<synchronous>, transform_indices = @transform_5, window_bounds = array<i64: 1, 32>}, {pipeline_mode = #tpu.pipeline_mode<synchronous>, transform_indices = @transform_6, window_bounds = array<i64: 1, 32>}, {pipeline_mode = #tpu.pipeline_mode<synchronous>, transform_indices = @transform_7, window_bounds = array<i64: 16, 32>}]} {
    %c0_i32 = arith.constant 0 : i32
    %0 = arith.cmpi eq, %arg0, %c0_i32 : i32
    %1 = arith.extui %0 : i1 to i32
    %c0_i32_0 = arith.constant 0 : i32
    %2 = arith.cmpi ne, %1, %c0_i32_0 : i32
    scf.if %2 {
      %c0_18 = arith.constant 0 : index
      %c0_19 = arith.constant 0 : index
      %35 = vector.load %arg1[%c0_18, %c0_19] : memref<16x32xf32, #tpu.memory_space<vmem>>, vector<16x32xf32>
      %36 = arith.truncf %35 : vector<16x32xf32> to vector<16x32xbf16>
      %c0_20 = arith.constant 0 : index
      %c0_21 = arith.constant 0 : index
      %37 = vector.load %arg2[%c0_20, %c0_21] : memref<32x64xbf16, #tpu.memory_space<vmem>>, vector<32x64xbf16>
      %cst_22 = arith.constant dense<0.000000e+00> : vector<16x64xf32>
      %38 = tpu.matmul %36, %37, %cst_22 {dimension_numbers = #tpu.dot_dimension_numbers<[1], [0], [0], [1], [0, 0, 1, 1], [], []>} : vector<16x32xbf16>, vector<32x64xbf16>, vector<16x64xf32> -> vector<16x64xf32>
      %39 = vector.extract_strided_slice %38 {offsets = [0, 0], sizes = [16, 32], strides = [1, 1]} : vector<16x64xf32> to vector<16x32xf32>
      %c0_23 = arith.constant 0 : index
      %c0_24 = arith.constant 0 : index
      %40 = vector.load %arg9[%c0_23, %c0_24] : memref<16x32xf32, #tpu.memory_space<vmem>>, vector<16x32xf32>
      tpu.vector_store %arg9[%c0_23, %c0_24], %39 {strides = array<i32>} : memref<16x32xf32, #tpu.memory_space<vmem>>, vector<16x32xf32>,
      %cst_25 = arith.constant 0.000000e+00 : bf16
      %41 = vector.broadcast %cst_25 : bf16 to vector<16x128xbf16>
      %c0_26 = arith.constant 0 : index
      %c0_27 = arith.constant 0 : index
      %42 = vector.load %arg10[%c0_26, %c0_27] : memref<16x128xbf16, #tpu.memory_space<vmem>>, vector<16x128xbf16>
      tpu.vector_store %arg10[%c0_26, %c0_27], %41 {strides = array<i32>} : memref<16x128xbf16, #tpu.memory_space<vmem>>, vector<16x128xbf16>,
      %43 = vector.extract_strided_slice %38 {offsets = [0, 32], sizes = [16, 32], strides = [1, 1]} : vector<16x64xf32> to vector<16x32xf32>
      %44 = arith.truncf %43 : vector<16x32xf32> to vector<16x32xbf16>
      %c0_28 = arith.constant 0 : index
      %c0_29 = arith.constant 0 : index
      %45 = vector.load %arg10[%c0_28, %c0_29] : memref<16x128xbf16, #tpu.memory_space<vmem>>, vector<16x32xbf16>
      tpu.vector_store %arg10[%c0_28, %c0_29], %44 {strides = array<i32>} : memref<16x128xbf16, #tpu.memory_space<vmem>>, vector<16x32xbf16>,
      %cst_30 = arith.constant 1.000000e+00 : bf16
      %46 = vector.broadcast %cst_30 : bf16 to vector<16x1xbf16>
      %c0_31 = arith.constant 0 : index
      %c32 = arith.constant 32 : index
      %47 = vector.load %arg10[%c0_31, %c32] : memref<16x128xbf16, #tpu.memory_space<vmem>>, vector<16x1xbf16>
      tpu.vector_store %arg10[%c0_31, %c32], %46 {strides = array<i32>} : memref<16x128xbf16, #tpu.memory_space<vmem>>, vector<16x1xbf16>,
      %cst_32 = arith.constant 0.000000e+00 : f32
      %48 = vector.broadcast %cst_32 : f32 to vector<16x128xf32>
      %c0_33 = arith.constant 0 : index
      %c0_34 = arith.constant 0 : index
      %49 = vector.load %arg11[%c0_33, %c0_34] : memref<16x128xf32, #tpu.memory_space<vmem>>, vector<16x128xf32>
      tpu.vector_store %arg11[%c0_33, %c0_34], %48 {strides = array<i32>} : memref<16x128xf32, #tpu.memory_space<vmem>>, vector<16x128xf32>,
    } else {
    }
    %c0 = arith.constant 0 : index
    %c0_1 = arith.constant 0 : index
    %3 = vector.load %arg4[%c0, %c0_1] : memref<256x1xi32, #tpu.memory_space<vmem>>, vector<256x1xi32>
    %c0_2 = arith.constant 0 : index
    %c0_3 = arith.constant 0 : index
    %c0_4 = arith.constant 0 : index
    %4 = vector.load %arg5[%c0_2, %c0_3, %c0_4] : memref<1x1x256xi32, #tpu.memory_space<vmem>>, vector<1x1x256xi32>
    %5 = vector.shape_cast %4 : vector<1x1x256xi32> to vector<1x256xi32>
    %c0_5 = arith.constant 0 : index
    %c0_6 = arith.constant 0 : index
    %c0_7 = arith.constant 0 : index
    %6 = vector.load %arg3[%c0_5, %c0_6, %c0_7] : memref<1x1x256xf32, #tpu.memory_space<vmem>>, vector<1x1x256xf32>
    %7 = vector.shape_cast %6 : vector<1x1x256xf32> to vector<1x256xf32>
    %8 = arith.negf %7 : vector<1x256xf32>
    %9 = math.exp %8 : vector<1x256xf32>
    %cst = arith.constant 1.000000e+00 : f32
    %10 = vector.broadcast %cst : f32 to vector<1x256xf32>
    %11 = arith.addf %10, %9 : vector<1x256xf32>
    %12 = arith.divf %10, %11 : vector<1x256xf32>
    %13 = tpu.iota {dimensions = array<i32: 1>} : vector<256x16xi32>
    %14 = vector.broadcast %3 : vector<256x1xi32> to vector<256x16xi32>
    %15 = arith.cmpi eq, %13, %14 : vector<256x16xi32>
    %16 = arith.extui %15 : vector<256x16xi1> to vector<256x16xi32>
    %17 = arith.sitofp %16 : vector<256x16xi32> to vector<256x16xf32>
    %18 = arith.truncf %17 : vector<256x16xf32> to vector<256x16xbf16>
    %19 = tpu.iota {dimensions = array<i32: 0>} : vector<16x256xi32>
    %20 = vector.broadcast %5 : vector<1x256xi32> to vector<16x256xi32>
    %21 = arith.cmpi eq, %19, %20 : vector<16x256xi32>
    %cst_8 = arith.constant 0.000000e+00 : f32
    %22 = vector.shape_cast %12 : vector<1x256xf32> to vector<1x256xf32>
    %23 = vector.broadcast %22 : vector<1x256xf32> to vector<16x256xf32>
    %24 = vector.broadcast %cst_8 : f32 to vector<16x256xf32>
    %25 = arith.select %21, %23, %24 : vector<16x256xi1>, vector<16x256xf32>
    %c0_9 = arith.constant 0 : index
    %c0_10 = arith.constant 0 : index
    %26 = vector.load %arg10[%c0_9, %c0_10] : memref<16x128xbf16, #tpu.memory_space<vmem>>, vector<16x128xbf16>
    %cst_11 = arith.constant dense<0.000000e+00> : vector<256x128xf32>
    %27 = tpu.matmul %18, %26, %cst_11 {dimension_numbers = #tpu.dot_dimension_numbers<[1], [0], [0], [1], [0, 0, 1, 1], [], []>} : vector<256x16xbf16>, vector<16x128xbf16>, vector<256x128xf32> -> vector<256x128xf32>
    %c0_12 = arith.constant 0 : index
    %c0_13 = arith.constant 0 : index
    %28 = vector.load %arg11[%c0_12, %c0_13] : memref<16x128xf32, #tpu.memory_space<vmem>>, vector<16x128xf32>
    %cst_14 = arith.constant dense<0.000000e+00> : vector<16x128xf32>
    %29 = tpu.matmul %25, %27, %cst_14 {dimension_numbers = #tpu.dot_dimension_numbers<[1], [0], [0], [1], [0, 0, 1, 1], [], []>} : vector<16x256xf32>, vector<256x128xf32>, vector<16x128xf32> -> vector<16x128xf32>
    %30 = arith.addf %28, %29 : vector<16x128xf32>
    %c0_15 = arith.constant 0 : index
    %c0_16 = arith.constant 0 : index
    %31 = vector.load %arg11[%c0_15, %c0_16] : memref<16x128xf32, #tpu.memory_space<vmem>>, vector<16x128xf32>
    tpu.vector_store %arg11[%c0_15, %c0_16], %30 {strides = array<i32>} : memref<16x128xf32, #tpu.memory_space<vmem>>, vector<16x128xf32>,
    %c2_i32 = arith.constant 2 : i32
    %32 = arith.cmpi eq, %arg0, %c2_i32 : i32
    %33 = arith.extui %32 : i1 to i32
    %c0_i32_17 = arith.constant 0 : i32
    %34 = arith.cmpi ne, %33, %c0_i32_17 : i32
    scf.if %34 {
      %c0_18 = arith.constant 0 : index
      %c0_19 = arith.constant 0 : index
      %35 = vector.load %arg11[%c0_18, %c0_19] : memref<16x128xf32, #tpu.memory_space<vmem>>, vector<16x32xf32>
      %c0_20 = arith.constant 0 : index
      %c32 = arith.constant 32 : index
      %36 = vector.load %arg11[%c0_20, %c32] : memref<16x128xf32, #tpu.memory_space<vmem>>, vector<16x1xf32>
      %cst_21 = arith.constant 9.99999997E-7 : f32
      %37 = vector.broadcast %cst_21 : f32 to vector<16x1xf32>
      %38 = arith.addf %36, %37 : vector<16x1xf32>
      %39 = vector.broadcast %38 : vector<16x1xf32> to vector<16x32xf32>
      %40 = arith.divf %35, %39 : vector<16x32xf32>
      %c0_22 = arith.constant 0 : index
      %c0_23 = arith.constant 0 : index
      %41 = vector.load %arg9[%c0_22, %c0_23] : memref<16x32xf32, #tpu.memory_space<vmem>>, vector<16x32xf32>
      %42 = arith.addf %41, %40 : vector<16x32xf32>
      %cst_24 = arith.constant dense<0.000000e+00> : vector<32xf32>
      %43 = vector.multi_reduction <add>, %42, %cst_24 [0] : vector<16x32xf32> to vector<32xf32>
      %44 = vector.shape_cast %43 : vector<32xf32> to vector<1x32xf32>
      %cst_25 = arith.constant 1.600000e+01 : f32
      %45 = vector.broadcast %cst_25 : f32 to vector<1x32xf32>
      %46 = arith.divf %44, %45 : vector<1x32xf32>
      %47 = vector.broadcast %46 : vector<1x32xf32> to vector<16x32xf32>
      %48 = arith.subf %42, %47 : vector<16x32xf32>
      %49 = arith.mulf %48, %48 : vector<16x32xf32>
      %cst_26 = arith.constant dense<0.000000e+00> : vector<32xf32>
      %50 = vector.multi_reduction <add>, %49, %cst_26 [0] : vector<16x32xf32> to vector<32xf32>
      %51 = vector.shape_cast %50 : vector<32xf32> to vector<1x32xf32>
      %cst_27 = arith.constant 1.600000e+01 : f32
      %52 = vector.broadcast %cst_27 : f32 to vector<1x32xf32>
      %53 = arith.divf %51, %52 : vector<1x32xf32>
      %54 = vector.broadcast %46 : vector<1x32xf32> to vector<16x32xf32>
      %55 = arith.subf %42, %54 : vector<16x32xf32>
      %cst_28 = arith.constant 9.99999974E-6 : f32
      %56 = vector.broadcast %cst_28 : f32 to vector<1x32xf32>
      %57 = arith.addf %53, %56 : vector<1x32xf32>
      %58 = math.rsqrt %57 : vector<1x32xf32>
      %59 = vector.broadcast %58 : vector<1x32xf32> to vector<16x32xf32>
      %60 = arith.mulf %55, %59 : vector<16x32xf32>
      %c0_29 = arith.constant 0 : index
      %c0_30 = arith.constant 0 : index
      %61 = vector.load %arg6[%c0_29, %c0_30] : memref<1x32xf32, #tpu.memory_space<vmem>>, vector<1x32xf32>
      %62 = vector.broadcast %61 : vector<1x32xf32> to vector<16x32xf32>
      %63 = arith.mulf %60, %62 : vector<16x32xf32>
      %c0_31 = arith.constant 0 : index
      %c0_32 = arith.constant 0 : index
      %64 = vector.load %arg7[%c0_31, %c0_32] : memref<1x32xf32, #tpu.memory_space<vmem>>, vector<1x32xf32>
      %65 = vector.broadcast %64 : vector<1x32xf32> to vector<16x32xf32>
      %66 = arith.addf %63, %65 : vector<16x32xf32>
      %c0_33 = arith.constant 0 : index
      %c0_34 = arith.constant 0 : index
      %67 = vector.load %arg1[%c0_33, %c0_34] : memref<16x32xf32, #tpu.memory_space<vmem>>, vector<16x32xf32>
      %cst_35 = arith.constant 0.000000e+00 : f32
      %68 = vector.broadcast %cst_35 : f32 to vector<16x32xf32>
      %69 = arith.maximumf %66, %68 : vector<16x32xf32>
      %70 = arith.addf %67, %69 : vector<16x32xf32>
      %c0_36 = arith.constant 0 : index
      %c0_37 = arith.constant 0 : index
      %71 = vector.load %arg8[%c0_36, %c0_37] : memref<16x32xf32, #tpu.memory_space<vmem>>, vector<16x32xf32>
      tpu.vector_store %arg8[%c0_36, %c0_37], %70 {strides = array<i32>} : memref<16x32xf32, #tpu.memory_space<vmem>>, vector<16x32xf32>,
    } else {
    }
    return
  }
  func.func @transform_0(%arg0: i32) -> (i32, i32) {
    %c0_i32 = arith.constant 0 : i32
    %c0_i32_0 = arith.constant 0 : i32
    %c0_i32_1 = arith.constant 0 : i32
    return %c0_i32, %c0_i32_0 : i32, i32
  }
  func.func @transform_1(%arg0: i32) -> (i32, i32) {
    %c0_i32 = arith.constant 0 : i32
    %c0_i32_0 = arith.constant 0 : i32
    %c0_i32_1 = arith.constant 0 : i32
    return %c0_i32, %c0_i32_0 : i32, i32
  }
  func.func @transform_2(%arg0: i32) -> (i32, i32, i32) {
    %c0_i32 = arith.constant 0 : i32
    %c0_i32_0 = arith.constant 0 : i32
    %c0_i32_1 = arith.constant 0 : i32
    return %arg0, %c0_i32, %c0_i32_0 : i32, i32, i32
  }
  func.func @transform_3(%arg0: i32) -> (i32, i32) {
    %c0_i32 = arith.constant 0 : i32
    %c0_i32_0 = arith.constant 0 : i32
    return %arg0, %c0_i32 : i32, i32
  }
  func.func @transform_4(%arg0: i32) -> (i32, i32, i32) {
    %c0_i32 = arith.constant 0 : i32
    %c0_i32_0 = arith.constant 0 : i32
    %c0_i32_1 = arith.constant 0 : i32
    return %arg0, %c0_i32, %c0_i32_0 : i32, i32, i32
  }
  func.func @transform_5(%arg0: i32) -> (i32, i32) {
    %c0_i32 = arith.constant 0 : i32
    %c0_i32_0 = arith.constant 0 : i32
    %c0_i32_1 = arith.constant 0 : i32
    return %c0_i32, %c0_i32_0 : i32, i32
  }
  func.func @transform_6(%arg0: i32) -> (i32, i32) {
    %c0_i32 = arith.constant 0 : i32
    %c0_i32_0 = arith.constant 0 : i32
    %c0_i32_1 = arith.constant 0 : i32
    return %c0_i32, %c0_i32_0 : i32, i32
  }
  func.func @transform_7(%arg0: i32) -> (i32, i32) {
    %c0_i32 = arith.constant 0 : i32
    %c0_i32_0 = arith.constant 0 : i32
    %c0_i32_1 = arith.constant 0 : i32
    return %c0_i32, %c0_i32_0 : i32, i32
  }
}

</mosaic_0001>

<llo_original>
// kernel: tpu_custom_call.1
$region0: #{tpu_custom_call.1}
  #allocation0 [shape = 'u32[]', space=smem, size = 0x4, offset = 0x4, fixed_abs, tag = 'smem constant byte address 0x4 - core index']
  #allocation1 [shape = 'u32[144,128]{1,0:T(1,128)}', space=vmem, size = 0x12000, scoped, tag = 'internal scratch']
  #allocation2 [shape = 'f32[16,32]{1,0:T(8,128)}', space=vmem, size = 0x2000, scoped, tag = 'scratch operand']
  #allocation3 [shape = 'bf16[16,128]{1,0:T(16,128)(2,1)}', space=vmem, size = 0x1000, scoped, tag = 'scratch operand']
  #allocation4 [shape = 'f32[16,128]{1,0:T(8,128)}', space=vmem, size = 0x2000, scoped, tag = 'scratch operand']
  %s0 = inlined_call_operand.vmem [shape: f32[16,32], index: 0, kind: input, shape index: {}]
  %s1 = inlined_call_operand.vmem [shape: bf16[32,64], index: 1, kind: input, shape index: {}]
  %s2 = inlined_call_operand.vmem [shape: f32[3,1,256], index: 2, kind: input, shape index: {}]
  %s3 = inlined_call_operand.vmem [shape: s32[768,1], index: 3, kind: input, shape index: {}]
  %s4 = inlined_call_operand.vmem [shape: s32[3,1,256], index: 4, kind: input, shape index: {}]
  %s5 = inlined_call_operand.vmem [shape: f32[1,32], index: 5, kind: input, shape index: {}]
  %s6 = inlined_call_operand.vmem [shape: f32[1,32], index: 6, kind: input, shape index: {}]
  %s7 = inlined_call_operand.hbm [shape: f32[16,32], index: 7, kind: output, shape index: {}]
  %s8 = sld [smem:[#allocation0]]
  $region69: #{tpu_custom_call.1} parent=0
    _
  %s10 = ssub.s32 1, %s8
  %s11 = scalar_select 0, %s10, %s8
  $region1: #{tpu_custom_call.1} parent=0
    #allocation5 [shape = 'u8[8192]{0}', space=vmem, size = 0x2000, scoped, tag = 'output window, operand 0, single buffered']
    #allocation6 [shape = 's32[2]{0}', space=sflag, size = 0x8, scoped, tag = 'scoped memory for tpu_custom_call.1']
    %12 = vsyncpa [#allocation6], 0
    loop: start=0, step=1, limit=5
    $region2: #{tpu_custom_call.1} parent=1 // loop_pre_header
      _
    $region3: #{tpu_custom_call.1} parent=1 // loop_header
      %s14 = sphi 0, %s18
      %p15 = scmp.ge.s32.totalorder %s14, 5
      %s22 = sphi 0, %s22
      %s24 = sphi 0, %s22
      %s25 = sphi 0, %s24
      %s39 = sphi 0, %s25
      %s43 = sphi 0, %s43
      %s45 = sphi 0, %s43
      %s46 = sphi 0, %s45
      %s60 = sphi 0, %s46
      %s66 = sphi 0, %s68
      %s69 = sphi 0, %s66
      %s70 = sphi 0, %s69
      %s86 = sphi 0, %s70
      %s92 = sphi 0, %s94
      %s95 = sphi 0, %s92
      %s96 = sphi 0, %s95
      %s112 = sphi 0, %s96
      %s118 = sphi 0, %s120
      %s121 = sphi 0, %s118
      %s122 = sphi 0, %s121
      %s138 = sphi 0, %s122
      %s142 = sphi 0, %s142
      %s144 = sphi 0, %s142
      %s145 = sphi 0, %s144
      %s159 = sphi 0, %s145
      %s163 = sphi 0, %s163
      %s165 = sphi 0, %s163
      %s166 = sphi 0, %s165
      %s180 = sphi 0, %s166
      %s184 = sphi 0, %s184
      %s186 = sphi 0, %s184
      %s187 = sphi 0, %s186
      %s201 = sphi 0, %s187
    $region4: #{tpu_custom_call.1} parent=1 // loop_header_branch
      %17 = sbr.rel (%p15) target = $region8
    $region5: #{tpu_custom_call.1} parent=1 // loop_body
      %s19 = ssub.s32 %s14, 1
      %s20 = ssub.s32 %s14, 2
      %s21 = sadd.s32 %s14, 1
      %s23 = sadd.s32 %s22, 1
      %p26 = scmp.eq.s32.totalorder %s14, 2
      %p27 = scmp.ne.s32.totalorder %s22, %s24
      %p28 = scmp.eq.s32.totalorder %s14, 0
      %p29 = por %p27, %p28
      %p30 = scmp.ne.s32.totalorder %s22, %s24
      %p31 = scmp.eq.s32.totalorder %s19, 2
      %p32 = por %p30, %p31
      %p33 = scmp.ne.s32.totalorder %s24, %s25
      %p34 = scmp.eq.s32.totalorder %s19, 0
      %p35 = por %p33, %p34
      %p36 = scmp.ne.s32.totalorder %s24, %s25
      %p37 = scmp.eq.s32.totalorder %s20, 2
      %p38 = por %p36, %p37
      %p40 = scmp.ne.s32.totalorder %s25, %s39
      %p41 = scmp.eq.s32.totalorder %s20, 0
      %p42 = por %p40, %p41
      %s44 = sadd.s32 %s43, 1
      %p47 = scmp.eq.s32.totalorder %s14, 2
      %p48 = scmp.ne.s32.totalorder %s43, %s45
      %p49 = scmp.eq.s32.totalorder %s14, 0
      %p50 = por %p48, %p49
      %p51 = scmp.ne.s32.totalorder %s43, %s45
      %p52 = scmp.eq.s32.totalorder %s19, 2
      %p53 = por %p51, %p52
      %p54 = scmp.ne.s32.totalorder %s45, %s46
      %p55 = scmp.eq.s32.totalorder %s19, 0
      %p56 = por %p54, %p55
      %p57 = scmp.ne.s32.totalorder %s45, %s46
      %p58 = scmp.eq.s32.totalorder %s20, 2
      %p59 = por %p57, %p58
      %p61 = scmp.ne.s32.totalorder %s46, %s60
      %p62 = scmp.eq.s32.totalorder %s20, 0
      %p63 = por %p61, %p62
      %s64 = ssub.s32 %s14, %s21
      %p65 = scmp.eq.s32.totalorder %s64, 0
      %s67 = sadd.s32 %s66, 1
      %s68 = scalar_select %p65, %s66, %s67
      %p71 = pneg %p65
      %p72 = scmp.eq.s32.totalorder %s14, 2
      %p73 = por %p71, %p72
      %p74 = scmp.ne.s32.totalorder %s66, %s69
      %p75 = scmp.eq.s32.totalorder %s14, 0
      %p76 = por %p74, %p75
      %p77 = scmp.ne.s32.totalorder %s66, %s69
      %p78 = scmp.eq.s32.totalorder %s19, 2
      %p79 = por %p77, %p78
      %p80 = scmp.ne.s32.totalorder %s69, %s70
      %p81 = scmp.eq.s32.totalorder %s19, 0
      %p82 = por %p80, %p81
      %p83 = scmp.ne.s32.totalorder %s69, %s70
      %p84 = scmp.eq.s32.totalorder %s20, 2
      %p85 = por %p83, %p84
      %p87 = scmp.ne.s32.totalorder %s70, %s86
      %p88 = scmp.eq.s32.totalorder %s20, 0
      %p89 = por %p87, %p88
      %s90 = ssub.s32 %s14, %s21
      %p91 = scmp.eq.s32.totalorder %s90, 0
      %s93 = sadd.s32 %s92, 1
      %s94 = scalar_select %p91, %s92, %s93
      %p97 = pneg %p91
      %p98 = scmp.eq.s32.totalorder %s14, 2
      %p99 = por %p97, %p98
      %p100 = scmp.ne.s32.totalorder %s92, %s95
      %p101 = scmp.eq.s32.totalorder %s14, 0
      %p102 = por %p100, %p101
      %p103 = scmp.ne.s32.totalorder %s92, %s95
      %p104 = scmp.eq.s32.totalorder %s19, 2
      %p105 = por %p103, %p104
      %p106 = scmp.ne.s32.totalorder %s95, %s96
      %p107 = scmp.eq.s32.totalorder %s19, 0
      %p108 = por %p106, %p107
      %p109 = scmp.ne.s32.totalorder %s95, %s96
      %p110 = scmp.eq.s32.totalorder %s20, 2
      %p111 = por %p109, %p110
      %p113 = scmp.ne.s32.totalorder %s96, %s112
      %p114 = scmp.eq.s32.totalorder %s20, 0
      %p115 = por %p113, %p114
      %s116 = ssub.s32 %s14, %s21
      %p117 = scmp.eq.s32.totalorder %s116, 0
      %s119 = sadd.s32 %s118, 1
      %s120 = scalar_select %p117, %s118, %s119
      %p123 = pneg %p117
      %p124 = scmp.eq.s32.totalorder %s14, 2
      %p125 = por %p123, %p124
      %p126 = scmp.ne.s32.totalorder %s118, %s121
      %p127 = scmp.eq.s32.totalorder %s14, 0
      %p128 = por %p126, %p127
      %p129 = scmp.ne.s32.totalorder %s118, %s121
      %p130 = scmp.eq.s32.totalorder %s19, 2
      %p131 = por %p129, %p130
      %p132 = scmp.ne.s32.totalorder %s121, %s122
      %p133 = scmp.eq.s32.totalorder %s19, 0
      %p134 = por %p132, %p133
      %p135 = scmp.ne.s32.totalorder %s121, %s122
      %p136 = scmp.eq.s32.totalorder %s20, 2
      %p137 = por %p135, %p136
      %p139 = scmp.ne.s32.totalorder %s122, %s138
      %p140 = scmp.eq.s32.totalorder %s20, 0
      %p141 = por %p139, %p140
      %s143 = sadd.s32 %s142, 1
      %p146 = scmp.eq.s32.totalorder %s14, 2
      %p147 = scmp.ne.s32.totalorder %s142, %s144
      %p148 = scmp.eq.s32.totalorder %s14, 0
      %p149 = por %p147, %p148
      %p150 = scmp.ne.s32.totalorder %s142, %s144
      %p151 = scmp.eq.s32.totalorder %s19, 2
      %p152 = por %p150, %p151
      %p153 = scmp.ne.s32.totalorder %s144, %s145
      %p154 = scmp.eq.s32.totalorder %s19, 0
      %p155 = por %p153, %p154
      %p156 = scmp.ne.s32.totalorder %s144, %s145
      %p157 = scmp.eq.s32.totalorder %s20, 2
      %p158 = por %p156, %p157
      %p160 = scmp.ne.s32.totalorder %s145, %s159
      %p161 = scmp.eq.s32.totalorder %s20, 0
      %p162 = por %p160, %p161
      %s164 = sadd.s32 %s163, 1
      %p167 = scmp.eq.s32.totalorder %s14, 2
      %p168 = scmp.ne.s32.totalorder %s163, %s165
      %p169 = scmp.eq.s32.totalorder %s14, 0
      %p170 = por %p168, %p169
      %p171 = scmp.ne.s32.totalorder %s163, %s165
      %p172 = scmp.eq.s32.totalorder %s19, 2
      %p173 = por %p171, %p172
      %p174 = scmp.ne.s32.totalorder %s165, %s166
      %p175 = scmp.eq.s32.totalorder %s19, 0
      %p176 = por %p174, %p175
      %p177 = scmp.ne.s32.totalorder %s165, %s166
      %p178 = scmp.eq.s32.totalorder %s20, 2
      %p179 = por %p177, %p178
      %p181 = scmp.ne.s32.totalorder %s166, %s180
      %p182 = scmp.eq.s32.totalorder %s20, 0
      %p183 = por %p181, %p182
      %s185 = sadd.s32 %s184, 1
      %p188 = scmp.eq.s32.totalorder %s14, 2
      %p189 = scmp.ne.s32.totalorder %s184, %s186
      %p190 = scmp.eq.s32.totalorder %s14, 0
      %p191 = por %p189, %p190
      %p192 = scmp.ne.s32.totalorder %s184, %s186
      %p193 = scmp.eq.s32.totalorder %s19, 2
      %p194 = por %p192, %p193
      %p195 = scmp.ne.s32.totalorder %s186, %s187
      %p196 = scmp.eq.s32.totalorder %s19, 0
      %p197 = por %p195, %p196
      %p198 = scmp.ne.s32.totalorder %s186, %s187
      %p199 = scmp.eq.s32.totalorder %s20, 2
      %p200 = por %p198, %p199
      %p202 = scmp.ne.s32.totalorder %s187, %s201
      %p203 = scmp.eq.s32.totalorder %s20, 0
      %p204 = por %p202, %p203
      %p205 = scmp.le.s32.totalorder 1, %s14
      %p206 = scmp.lt.s32.totalorder %s14, 4
      %p207 = pnand %p205, %p206
      %p208 = pneg %p207
      // Predicated region
      $region9: #{tpu_custom_call.1} parent=5 // pred_check
        _
      $region10: #{tpu_custom_call.1} parent=5 // pred_check_branch
        %210 = sbr.rel (%p207) target = $region12
      $region11: #{tpu_custom_call.1} parent=5 // pred_region
        %s211 = ssub.s32 %s14, 1
        // Predicated region
        $region13: #{tpu_custom_call.1} parent=11 // pred_check
          %p212 = pneg %p35
        $region14: #{tpu_custom_call.1} parent=11 // pred_check_branch
          %214 = sbr.rel (%p212) target = $region16
        $region15: #{tpu_custom_call.1} parent=11 // pred_region
          _
        $region16: #{tpu_custom_call.1} parent=11 // pred_fallthru
          _
        // Predicated region
        $region17: #{tpu_custom_call.1} parent=11 // pred_check
          %p215 = pneg %p56
        $region18: #{tpu_custom_call.1} parent=11 // pred_check_branch
          %217 = sbr.rel (%p215) target = $region20
        $region19: #{tpu_custom_call.1} parent=11 // pred_region
          _
        $region20: #{tpu_custom_call.1} parent=11 // pred_fallthru
          _
        // Predicated region
        $region21: #{tpu_custom_call.1} parent=11 // pred_check
          %p218 = pneg %p155
        $region22: #{tpu_custom_call.1} parent=11 // pred_check_branch
          %220 = sbr.rel (%p218) target = $region24
        $region23: #{tpu_custom_call.1} parent=11 // pred_region
          _
        $region24: #{tpu_custom_call.1} parent=11 // pred_fallthru
          _
        // Predicated region
        $region25: #{tpu_custom_call.1} parent=11 // pred_check
          %p221 = pneg %p176
        $region26: #{tpu_custom_call.1} parent=11 // pred_check_branch
          %223 = sbr.rel (%p221) target = $region28
        $region27: #{tpu_custom_call.1} parent=11 // pred_region
          _
        $region28: #{tpu_custom_call.1} parent=11 // pred_fallthru
          _
      $region12: #{tpu_custom_call.1} parent=5 // pred_fallthru
        _
      %p224 = scmp.lt.s32.totalorder %s14, 3
      // Predicated region
      $region29: #{tpu_custom_call.1} parent=5 // pred_check
        %p225 = pneg %p224
      $region30: #{tpu_custom_call.1} parent=5 // pred_check_branch
        %227 = sbr.rel (%p225) target = $region32
      $region31: #{tpu_custom_call.1} parent=5 // pred_region
        // Predicated region
        $region33: #{tpu_custom_call.1} parent=31 // pred_check
          %p228 = pneg %p76
        $region34: #{tpu_custom_call.1} parent=31 // pred_check_branch
          %230 = sbr.rel (%p228) target = $region36
        $region35: #{tpu_custom_call.1} parent=31 // pred_region
          %p231 = scmp.lt.s32.totalorder %s14, 2
          %s232 = scalar_select %p231, %s14, 2
          %s233 = smul.addr %s232, 2
          %s234 = scalar_lea.vmem %s2, %s233
        $region36: #{tpu_custom_call.1} parent=31 // pred_fallthru
          _
        // Predicated region
        $region37: #{tpu_custom_call.1} parent=31 // pred_check
          %p235 = pneg %p102
        $region38: #{tpu_custom_call.1} parent=31 // pred_check_branch
          %237 = sbr.rel (%p235) target = $region40
        $region39: #{tpu_custom_call.1} parent=31 // pred_region
          %s238 = smul.u32 32, %s14
          %p239 = scmp.lt.s32.totalorder %s238, 95
          %s240 = scalar_select %p239, %s238, 95
          %s241 = smul.addr %s240, 8
          %s242 = scalar_lea.vmem %s3, %s241
          %s243 = smul.u32 32, %s14
        $region40: #{tpu_custom_call.1} parent=31 // pred_fallthru
          _
        // Predicated region
        $region41: #{tpu_custom_call.1} parent=31 // pred_check
          %p244 = pneg %p128
        $region42: #{tpu_custom_call.1} parent=31 // pred_check_branch
          %246 = sbr.rel (%p244) target = $region44
        $region43: #{tpu_custom_call.1} parent=31 // pred_region
          %p247 = scmp.lt.s32.totalorder %s14, 2
          %s248 = scalar_select %p247, %s14, 2
          %s249 = smul.addr %s248, 2
          %s250 = scalar_lea.vmem %s4, %s249
        $region44: #{tpu_custom_call.1} parent=31 // pred_fallthru
          _
      $region32: #{tpu_custom_call.1} parent=5 // pred_fallthru
        _
      %p251 = scmp.le.s32.totalorder 1, %s14
      %p252 = scmp.lt.s32.totalorder %s14, 4
      %p253 = pnand %p251, %p252
      %p254 = pneg %p253
      // Predicated region
      $region45: #{tpu_custom_call.1} parent=5 // pred_check
        _
      $region46: #{tpu_custom_call.1} parent=5 // pred_check_branch
        %256 = sbr.rel (%p253) target = $region48
      $region47: #{tpu_custom_call.1} parent=5 // pred_region
        %s257 = ssub.s32 %s14, 1
        %p258 = pneg %p35
        %p259 = pneg %p32
        %p260 = pneg %p56
        %p261 = pneg %p53
        %p262 = scmp.lt.s32.totalorder %s19, 2
        %s263 = scalar_select %p262, %s19, 2
        %s264 = smul.addr %s263, 2
        %s265 = scalar_lea.vmem %s2, %s264
        %p266 = pneg %p82
        %p267 = pneg %p79
        %s268 = smul.u32 32, %s19
        %p269 = scmp.lt.s32.totalorder %s268, 95
        %s270 = scalar_select %p269, %s268, 95
        %s271 = smul.addr %s270, 8
        %s272 = scalar_lea.vmem %s3, %s271
        %p273 = pneg %p108
        %p274 = pneg %p105
        %p275 = scmp.lt.s32.totalorder %s19, 2
        %s276 = scalar_select %p275, %s19, 2
        %s277 = smul.addr %s276, 2
        %s278 = scalar_lea.vmem %s4, %s277
        %p279 = pneg %p134
        %p280 = pneg %p131
        %p281 = pneg %p155
        %p282 = pneg %p152
        %p283 = pneg %p176
        %p284 = pneg %p173
        %p285 = pneg %p197
        %p286 = pneg %p194
        %p287 = scmp.lt.s32.totalorder %s19, 2
        %s288 = scalar_select %p287, %s19, 2
        %s289 = smul.addr %s288, 2
        %s290 = scalar_lea.vmem %s2, %s289
        %s291 = smul.u32 32, %s19
        %p292 = scmp.lt.s32.totalorder %s291, 95
        %s293 = scalar_select %p292, %s291, 95
        %s294 = smul.addr %s293, 8
        %s295 = scalar_lea.vmem %s3, %s294
        %s296 = smul.u32 32, %s19
        %p297 = scmp.lt.s32.totalorder %s19, 2
        %s298 = scalar_select %p297, %s19, 2
        %s299 = smul.addr %s298, 2
        %s300 = scalar_lea.vmem %s4, %s299
        %p303 = scmp.eq.s32.totalorder %s19, 0
        // Predicated region
        $region49: #{tpu_custom_call.1} parent=47 // pred_check
          %p304 = pneg %p303
        $region50: #{tpu_custom_call.1} parent=47 // pred_check_branch
          %306 = sbr.rel (%p304) target = $region52
        $region51: #{tpu_custom_call.1} parent=47 // pred_region
          %v307 = vld [vmem:[%s0] sm:$0xff]
          %v308 = vld [vmem:[%s0 + $0x8] sm:$0xff]
          %v309 = vpack.c.bf16 %v308, %v307
          %v310 = vld [vmem:[%s1] sm:$0xf]
          %v311 = vld [vmem:[%s1 + $0x4] sm:$0xf]
          %v312 = vld [vmem:[%s1 + $0x8] sm:$0xf]
          %v313 = vld [vmem:[%s1 + $0xc] sm:$0xf]
          %v318 = vunpack.c.l.b16 %v310
          %v319 = vunpack.c.l.b16 %v311
          %v320 = vunpack.c.l.b16 %v312
          %v321 = vunpack.c.l.b16 %v313
          %v322 = vpack.c.b16 %v319, %v318
          %v323 = vpack.c.b16 %v321, %v320
          %vm326 = vcmask 261120
          %v328 = vsel %vm326, %v309, 0
          %330 = vmatprep.subr.bf16.mxu0 0
          %331 = vmatpush1.bf16.msra.mxu0 %v322
          %332 = vmatprep.subr.bf16.mxu0 0
          %333 = vmatpush1.bf16.msra.mxu0 %v323
          %334 = vmatprep.subr.bf16.mxu0 0
          %335 = vmatpush1.bf16.msra.mxu0 0
          %336 = vmatprep.subr.bf16.mxu0 0
          %337 = vmatpush1.bf16.msra.mxu0 0
          %338 = vmatprep.subr.bf16.mxu0 0
          %339 = vmatpush1.bf16.msra.mxu0 0
          %340 = vmatprep.subr.bf16.mxu0 0
          %341 = vmatpush1.bf16.msra.mxu0 0
          %342 = vmatprep.subr.bf16.mxu0 0
          %343 = vmatpush1.bf16.msra.mxu0 0
          %344 = vmatprep.subr.bf16.mxu0 0
          %345 = vmatpush1.bf16.msra.mxu0 0
          %346 = vmatprep.subr.bf16.mxu0 0
          %347 = vmatpush1.bf16.msra.mxu0 0
          %348 = vmatprep.subr.bf16.mxu0 0
          %349 = vmatpush1.bf16.msra.mxu0 0
          %350 = vmatprep.subr.bf16.mxu0 0
          %351 = vmatpush1.bf16.msra.mxu0 0
          %352 = vmatprep.subr.bf16.mxu0 0
          %353 = vmatpush1.bf16.msra.mxu0 0
          %354 = vmatprep.subr.bf16.mxu0 0
          %355 = vmatpush1.bf16.msra.mxu0 0
          %356 = vmatprep.subr.bf16.mxu0 0
          %357 = vmatpush1.bf16.msra.mxu0 0
          %358 = vmatprep.subr.bf16.mxu0 0
          %359 = vmatpush1.bf16.msra.mxu0 0
          %360 = vmatprep.subr.bf16.mxu0 0
          %361 = vmatpush1.bf16.msra.mxu0 0
          %362 = vmatprep.mubr.bf16.mxu0 0
          %363 = vmatmul.mubr.bf16.gmra.mrb[0].mxu0 %v328
          %v364 = vpop.f32.mrb[0].mxu0
          %v365 = vadd.f32 0.0, %v364
          %v366 = vpop.f32.mrb[0].mxu0
          %v367 = vpop.f32.mrb[0].mxu0
          %v368 = vadd.f32 0.0, %v367
          %v369 = vpop.f32.mrb[0].mxu0
          %370 = vdwg.mxu0
          %371 = vst.msk [vmem:[#allocation2] sm:$0xff] %vm326, %v365
          %372 = vst.msk [vmem:[#allocation2 + $0x8] sm:$0xff] %vm326, %v368
          %373 = vst [vmem:[#allocation3] sm:$0xff] 0
          %v374 = vpack.c.bf16 %v368, %v365
          %376 = vrot.lane.b32.xlu0 %v374, 96
          %v377 = vpop.permute.xlu0 %376
          %379 = vst.msk [vmem:[#allocation3] sm:$0xff] %vm326, %v377
          %vm380 = vcmask 269568
          %381 = vst.msk [vmem:[#allocation3] sm:$0xff] %vm380, 1065369472
          %382 = vst [vmem:[#allocation4] sm:$0xff] 0.0
          %383 = vst [vmem:[#allocation4 + $0x8] sm:$0xff] 0.0
        $region52: #{tpu_custom_call.1} parent=47 // pred_fallthru
          _
        %v384 = vld [vmem:[%s295] sm:$0xff]
        %v385 = vld [vmem:[%s295 + $0x8] sm:$0xff]
        %v386 = vld [vmem:[%s295 + $0x10] sm:$0xff]
        %v387 = vld [vmem:[%s295 + $0x18] sm:$0xff]
        %v388 = vld [vmem:[%s295 + $0x20] sm:$0xff]
        %v389 = vld [vmem:[%s295 + $0x28] sm:$0xff]
        %v390 = vld [vmem:[%s295 + $0x30] sm:$0xff]
        %v391 = vld [vmem:[%s295 + $0x38] sm:$0xff]
        %v392 = vld [vmem:[%s295 + $0x40] sm:$0xff]
        %v393 = vld [vmem:[%s295 + $0x48] sm:$0xff]
        %v394 = vld [vmem:[%s295 + $0x50] sm:$0xff]
        %v395 = vld [vmem:[%s295 + $0x58] sm:$0xff]
        %v396 = vld [vmem:[%s295 + $0x60] sm:$0xff]
        %v397 = vld [vmem:[%s295 + $0x68] sm:$0xff]
        %v398 = vld [vmem:[%s295 + $0x70] sm:$0xff]
        %v399 = vld [vmem:[%s295 + $0x78] sm:$0xff]
        %v400 = vld [vmem:[%s295 + $0x80] sm:$0xff]
        %v401 = vld [vmem:[%s295 + $0x88] sm:$0xff]
        %v402 = vld [vmem:[%s295 + $0x90] sm:$0xff]
        %v403 = vld [vmem:[%s295 + $0x98] sm:$0xff]
        %v404 = vld [vmem:[%s295 + $0xa0] sm:$0xff]
        %v405 = vld [vmem:[%s295 + $0xa8] sm:$0xff]
        %v406 = vld [vmem:[%s295 + $0xb0] sm:$0xff]
        %v407 = vld [vmem:[%s295 + $0xb8] sm:$0xff]
        %v408 = vld [vmem:[%s295 + $0xc0] sm:$0xff]
        %v409 = vld [vmem:[%s295 + $0xc8] sm:$0xff]
        %v410 = vld [vmem:[%s295 + $0xd0] sm:$0xff]
        %v411 = vld [vmem:[%s295 + $0xd8] sm:$0xff]
        %v412 = vld [vmem:[%s295 + $0xe0] sm:$0xff]
        %v413 = vld [vmem:[%s295 + $0xe8] sm:$0xff]
        %v414 = vld [vmem:[%s295 + $0xf0] sm:$0xff]
        %v415 = vld [vmem:[%s295 + $0xf8] sm:$0xff]
        %v416 = vld [vmem:[%s300] sm:$0x3]
        %v417 = vld [vmem:[%s290] sm:$0x3]
        %v418 = vxor.u32 %v417, 2147483648
        %v419 = vmul.f32 %v418, 1.442695
        %v420 = vpow.pop %v419
        %v421 = vadd.f32 %v420, 1.0
        %v422 = vrcp.pop %v421
        %v423 = vmul.f32 1.0, %v422
        %v424 = vlaneseq
        %v425 = vand.u32 %v424, 127
        %426 = vset.pattern.permute.xlu0 0
        %427 = vperm.xlu0 %426, %v384
        %v428 = vpop.permute.xlu0 %427
        %429 = vset.pattern.permute.xlu0 0
        %430 = vperm.xlu0 %429, %v385
        %v431 = vpop.permute.xlu0 %430
        %432 = vset.pattern.permute.xlu0 0
        %433 = vperm.xlu0 %432, %v386
        %v434 = vpop.permute.xlu0 %433
        %435 = vset.pattern.permute.xlu0 0
        %436 = vperm.xlu0 %435, %v387
        %v437 = vpop.permute.xlu0 %436
        %438 = vset.pattern.permute.xlu0 0
        %439 = vperm.xlu0 %438, %v388
        %v440 = vpop.permute.xlu0 %439
        %441 = vset.pattern.permute.xlu0 0
        %442 = vperm.xlu0 %441, %v389
        %v443 = vpop.permute.xlu0 %442
        %444 = vset.pattern.permute.xlu0 0
        %445 = vperm.xlu0 %444, %v390
        %v446 = vpop.permute.xlu0 %445
        %447 = vset.pattern.permute.xlu0 0
        %448 = vperm.xlu0 %447, %v391
        %v449 = vpop.permute.xlu0 %448
        %450 = vset.pattern.permute.xlu0 0
        %451 = vperm.xlu0 %450, %v392
        %v452 = vpop.permute.xlu0 %451
        %453 = vset.pattern.permute.xlu0 0
        %454 = vperm.xlu0 %453, %v393
        %v455 = vpop.permute.xlu0 %454
        %456 = vset.pattern.permute.xlu0 0
        %457 = vperm.xlu0 %456, %v394
        %v458 = vpop.permute.xlu0 %457
        %459 = vset.pattern.permute.xlu0 0
        %460 = vperm.xlu0 %459, %v395
        %v461 = vpop.permute.xlu0 %460
        %462 = vset.pattern.permute.xlu0 0
        %463 = vperm.xlu0 %462, %v396
        %v464 = vpop.permute.xlu0 %463
        %465 = vset.pattern.permute.xlu0 0
        %466 = vperm.xlu0 %465, %v397
        %v467 = vpop.permute.xlu0 %466
        %468 = vset.pattern.permute.xlu0 0
        %469 = vperm.xlu0 %468, %v398
        %v470 = vpop.permute.xlu0 %469
        %471 = vset.pattern.permute.xlu0 0
        %472 = vperm.xlu0 %471, %v399
        %v473 = vpop.permute.xlu0 %472
        %474 = vset.pattern.permute.xlu0 0
        %475 = vperm.xlu0 %474, %v400
        %v476 = vpop.permute.xlu0 %475
        %477 = vset.pattern.permute.xlu0 0
        %478 = vperm.xlu0 %477, %v401
        %v479 = vpop.permute.xlu0 %478
        %480 = vset.pattern.permute.xlu0 0
        %481 = vperm.xlu0 %480, %v402
        %v482 = vpop.permute.xlu0 %481
        %483 = vset.pattern.permute.xlu0 0
        %484 = vperm.xlu0 %483, %v403
        %v485 = vpop.permute.xlu0 %484
        %486 = vset.pattern.permute.xlu0 0
        %487 = vperm.xlu0 %486, %v404
        %v488 = vpop.permute.xlu0 %487
        %489 = vset.pattern.permute.xlu0 0
        %490 = vperm.xlu0 %489, %v405
        %v491 = vpop.permute.xlu0 %490
        %492 = vset.pattern.permute.xlu0 0
        %493 = vperm.xlu0 %492, %v406
        %v494 = vpop.permute.xlu0 %493
        %495 = vset.pattern.permute.xlu0 0
        %496 = vperm.xlu0 %495, %v407
        %v497 = vpop.permute.xlu0 %496
        %498 = vset.pattern.permute.xlu0 0
        %499 = vperm.xlu0 %498, %v408
        %v500 = vpop.permute.xlu0 %499
        %501 = vset.pattern.permute.xlu0 0
        %502 = vperm.xlu0 %501, %v409
        %v503 = vpop.permute.xlu0 %502
        %504 = vset.pattern.permute.xlu0 0
        %505 = vperm.xlu0 %504, %v410
        %v506 = vpop.permute.xlu0 %505
        %507 = vset.pattern.permute.xlu0 0
        %508 = vperm.xlu0 %507, %v411
        %v509 = vpop.permute.xlu0 %508
        %510 = vset.pattern.permute.xlu0 0
        %511 = vperm.xlu0 %510, %v412
        %v512 = vpop.permute.xlu0 %511
        %513 = vset.pattern.permute.xlu0 0
        %514 = vperm.xlu0 %513, %v413
        %v515 = vpop.permute.xlu0 %514
        %516 = vset.pattern.permute.xlu0 0
        %517 = vperm.xlu0 %516, %v414
        %v518 = vpop.permute.xlu0 %517
        %519 = vset.pattern.permute.xlu0 0
        %520 = vperm.xlu0 %519, %v415
        %v521 = vpop.permute.xlu0 %520
        %vm522 = vcmp.eq.s32.totalorder %v425, %v428
        %vm523 = vcmp.eq.s32.totalorder %v425, %v431
        %vm524 = vcmp.eq.s32.totalorder %v425, %v434
        %vm525 = vcmp.eq.s32.totalorder %v425, %v437
        %vm526 = vcmp.eq.s32.totalorder %v425, %v440
        %vm527 = vcmp.eq.s32.totalorder %v425, %v443
        %vm528 = vcmp.eq.s32.totalorder %v425, %v446
        %vm529 = vcmp.eq.s32.totalorder %v425, %v449
        %vm530 = vcmp.eq.s32.totalorder %v425, %v452
        %vm531 = vcmp.eq.s32.totalorder %v425, %v455
        %vm532 = vcmp.eq.s32.totalorder %v425, %v458
        %vm533 = vcmp.eq.s32.totalorder %v425, %v461
        %vm534 = vcmp.eq.s32.totalorder %v425, %v464
        %vm535 = vcmp.eq.s32.totalorder %v425, %v467
        %vm536 = vcmp.eq.s32.totalorder %v425, %v470
        %vm537 = vcmp.eq.s32.totalorder %v425, %v473
        %vm538 = vcmp.eq.s32.totalorder %v425, %v476
        %vm539 = vcmp.eq.s32.totalorder %v425, %v479
        %vm540 = vcmp.eq.s32.totalorder %v425, %v482
        %vm541 = vcmp.eq.s32.totalorder %v425, %v485
        %vm542 = vcmp.eq.s32.totalorder %v425, %v488
        %vm543 = vcmp.eq.s32.totalorder %v425, %v491
        %vm544 = vcmp.eq.s32.totalorder %v425, %v494
        %vm545 = vcmp.eq.s32.totalorder %v425, %v497
        %vm546 = vcmp.eq.s32.totalorder %v425, %v500
        %vm547 = vcmp.eq.s32.totalorder %v425, %v503
        %vm548 = vcmp.eq.s32.totalorder %v425, %v506
        %vm549 = vcmp.eq.s32.totalorder %v425, %v509
        %vm550 = vcmp.eq.s32.totalorder %v425, %v512
        %vm551 = vcmp.eq.s32.totalorder %v425, %v515
        %vm552 = vcmp.eq.s32.totalorder %v425, %v518
        %vm553 = vcmp.eq.s32.totalorder %v425, %v521
        %v554 = vsel %vm522, 1, 0
        %v555 = vsel %vm523, 1, 0
        %v556 = vsel %vm524, 1, 0
        %v557 = vsel %vm525, 1, 0
        %v558 = vsel %vm526, 1, 0
        %v559 = vsel %vm527, 1, 0
        %v560 = vsel %vm528, 1, 0
        %v561 = vsel %vm529, 1, 0
        %v562 = vsel %vm530, 1, 0
        %v563 = vsel %vm531, 1, 0
        %v564 = vsel %vm532, 1, 0
        %v565 = vsel %vm533, 1, 0
        %v566 = vsel %vm534, 1, 0
        %v567 = vsel %vm535, 1, 0
        %v568 = vsel %vm536, 1, 0
        %v569 = vsel %vm537, 1, 0
        %v570 = vsel %vm538, 1, 0
        %v571 = vsel %vm539, 1, 0
        %v572 = vsel %vm540, 1, 0
        %v573 = vsel %vm541, 1, 0
        %v574 = vsel %vm542, 1, 0
        %v575 = vsel %vm543, 1, 0
        %v576 = vsel %vm544, 1, 0
        %v577 = vsel %vm545, 1, 0
        %v578 = vsel %vm546, 1, 0
        %v579 = vsel %vm547, 1, 0
        %v580 = vsel %vm548, 1, 0
        %v581 = vsel %vm549, 1, 0
        %v582 = vsel %vm550, 1, 0
        %v583 = vsel %vm551, 1, 0
        %v584 = vsel %vm552, 1, 0
        %v585 = vsel %vm553, 1, 0
        %v586 = vcvt.s32.f32 %v554
        %v587 = vcvt.s32.f32 %v555
        %v588 = vcvt.s32.f32 %v556
        %v589 = vcvt.s32.f32 %v557
        %v590 = vcvt.s32.f32 %v558
        %v591 = vcvt.s32.f32 %v559
        %v592 = vcvt.s32.f32 %v560
        %v593 = vcvt.s32.f32 %v561
        %v594 = vcvt.s32.f32 %v562
        %v595 = vcvt.s32.f32 %v563
        %v596 = vcvt.s32.f32 %v564
        %v597 = vcvt.s32.f32 %v565
        %v598 = vcvt.s32.f32 %v566
        %v599 = vcvt.s32.f32 %v567
        %v600 = vcvt.s32.f32 %v568
        %v601 = vcvt.s32.f32 %v569
        %v602 = vcvt.s32.f32 %v570
        %v603 = vcvt.s32.f32 %v571
        %v604 = vcvt.s32.f32 %v572
        %v605 = vcvt.s32.f32 %v573
        %v606 = vcvt.s32.f32 %v574
        %v607 = vcvt.s32.f32 %v575
        %v608 = vcvt.s32.f32 %v576
        %v609 = vcvt.s32.f32 %v577
        %v610 = vcvt.s32.f32 %v578
        %v611 = vcvt.s32.f32 %v579
        %v612 = vcvt.s32.f32 %v580
        %v613 = vcvt.s32.f32 %v581
        %v614 = vcvt.s32.f32 %v582
        %v615 = vcvt.s32.f32 %v583
        %v616 = vcvt.s32.f32 %v584
        %v617 = vcvt.s32.f32 %v585
        %v618 = vpack.c.bf16 %v587, %v586
        %v619 = vpack.c.bf16 %v589, %v588
        %v620 = vpack.c.bf16 %v591, %v590
        %v621 = vpack.c.bf16 %v593, %v592
        %v622 = vpack.c.bf16 %v595, %v594
        %v623 = vpack.c.bf16 %v597, %v596
        %v624 = vpack.c.bf16 %v599, %v598
        %v625 = vpack.c.bf16 %v601, %v600
        %v626 = vpack.c.bf16 %v603, %v602
        %v627 = vpack.c.bf16 %v605, %v604
        %v628 = vpack.c.bf16 %v607, %v606
        %v629 = vpack.c.bf16 %v609, %v608
        %v630 = vpack.c.bf16 %v611, %v610
        %v631 = vpack.c.bf16 %v613, %v612
        %v632 = vpack.c.bf16 %v615, %v614
        %v633 = vpack.c.bf16 %v617, %v616
        %v634 = vlaneseq
        %v635 = vshrl.u32 %v634, 7
        %v636 = vadd.s32 %v635, 8
        %v637 = vlaneseq
        %v638 = vshrl.u32 %v637, 7
        %v639 = vsub.s32 0, %v638
        %v640 = vrot.slane %v416, %v639
        %v641 = vlaneseq
        %v642 = vshrl.u32 %v641, 7
        %v643 = vsub.s32 1, %v642
        %v644 = vrot.slane %v416, %v643
        %vm645 = vcmp.eq.s32.totalorder %v635, %v640
        %vm646 = vcmp.eq.s32.totalorder %v635, %v644
        %vm647 = vcmp.eq.s32.totalorder %v636, %v640
        %vm648 = vcmp.eq.s32.totalorder %v636, %v644
        %v650 = vlaneseq
        %v651 = vshrl.u32 %v650, 7
        %v652 = vsub.s32 0, %v651
        %v653 = vrot.slane %v423, %v652
        %v654 = vlaneseq
        %v655 = vshrl.u32 %v654, 7
        %v656 = vsub.s32 1, %v655
        %v657 = vrot.slane %v423, %v656
        %v660 = vsel %vm645, %v653, 0.0
        %v661 = vsel %vm646, %v657, 0.0
        %v662 = vsel %vm647, %v653, 0.0
        %v663 = vsel %vm648, %v657, 0.0
        %v664 = vld [vmem:[#allocation3] sm:$0xff]
        %vm665 = vcmask 130048
        %v667 = vsel %vm665, %v618, 0
        %v670 = vsel %vm665, %v619, 0
        %v673 = vsel %vm665, %v620, 0
        %v676 = vsel %vm665, %v621, 0
        %v679 = vsel %vm665, %v622, 0
        %v682 = vsel %vm665, %v623, 0
        %v685 = vsel %vm665, %v624, 0
        %v688 = vsel %vm665, %v625, 0
        %v691 = vsel %vm665, %v626, 0
        %v694 = vsel %vm665, %v627, 0
        %v697 = vsel %vm665, %v628, 0
        %v700 = vsel %vm665, %v629, 0
        %v703 = vsel %vm665, %v630, 0
        %v706 = vsel %vm665, %v631, 0
        %v709 = vsel %vm665, %v632, 0
        %v712 = vsel %vm665, %v633, 0
        %714 = vmatprep.subr.bf16.mxu0 0
        %715 = vmatpush1.bf16.msra.mxu0 %v664
        %716 = vmatprep.subr.bf16.mxu0 0
        %717 = vmatpush1.bf16.msra.mxu0 0
        %718 = vmatprep.subr.bf16.mxu0 0
        %719 = vmatpush1.bf16.msra.mxu0 0
        %720 = vmatprep.subr.bf16.mxu0 0
        %721 = vmatpush1.bf16.msra.mxu0 0
        %722 = vmatprep.subr.bf16.mxu0 0
        %723 = vmatpush1.bf16.msra.mxu0 0
        %724 = vmatprep.subr.bf16.mxu0 0
        %725 = vmatpush1.bf16.msra.mxu0 0
        %726 = vmatprep.subr.bf16.mxu0 0
        %727 = vmatpush1.bf16.msra.mxu0 0
        %728 = vmatprep.subr.bf16.mxu0 0
        %729 = vmatpush1.bf16.msra.mxu0 0
        %730 = vmatprep.subr.bf16.mxu0 0
        %731 = vmatpush1.bf16.msra.mxu0 0
        %732 = vmatprep.subr.bf16.mxu0 0
        %733 = vmatpush1.bf16.msra.mxu0 0
        %734 = vmatprep.subr.bf16.mxu0 0
        %735 = vmatpush1.bf16.msra.mxu0 0
        %736 = vmatprep.subr.bf16.mxu0 0
        %737 = vmatpush1.bf16.msra.mxu0 0
        %738 = vmatprep.subr.bf16.mxu0 0
        %739 = vmatpush1.bf16.msra.mxu0 0
        %740 = vmatprep.subr.bf16.mxu0 0
        %741 = vmatpush1.bf16.msra.mxu0 0
        %742 = vmatprep.subr.bf16.mxu0 0
        %743 = vmatpush1.bf16.msra.mxu0 0
        %744 = vmatprep.subr.bf16.mxu0 0
        %745 = vmatpush1.bf16.msra.mxu0 0
        %746 = vmatprep.mubr.bf16.mxu0 0
        %747 = vmatmul.mubr.bf16.gmra.mrb[0].mxu0 %v667
        %v748 = vpop.f32.mrb[0].mxu0
        %v749 = vadd.f32 0.0, %v748
        %v750 = vpop.f32.mrb[0].mxu0
        %v751 = vpop.f32.mrb[0].mxu0
        %v752 = vadd.f32 0.0, %v751
        %v753 = vpop.f32.mrb[0].mxu0
        %754 = vmatprep.mubr.bf16.mxu0 0
        %755 = vmatmul.mubr.bf16.gmra.mrb[0].mxu0 %v670
        %v756 = vpop.f32.mrb[0].mxu0
        %v757 = vadd.f32 0.0, %v756
        %v758 = vpop.f32.mrb[0].mxu0
        %v759 = vpop.f32.mrb[0].mxu0
        %v760 = vadd.f32 0.0, %v759
        %v761 = vpop.f32.mrb[0].mxu0
        %762 = vmatprep.mubr.bf16.mxu0 0
        %763 = vmatmul.mubr.bf16.gmra.mrb[0].mxu0 %v673
        %v764 = vpop.f32.mrb[0].mxu0
        %v765 = vadd.f32 0.0, %v764
        %v766 = vpop.f32.mrb[0].mxu0
        %v767 = vpop.f32.mrb[0].mxu0
        %v768 = vadd.f32 0.0, %v767
        %v769 = vpop.f32.mrb[0].mxu0
        %770 = vmatprep.mubr.bf16.mxu0 0
        %771 = vmatmul.mubr.bf16.gmra.mrb[0].mxu0 %v676
        %v772 = vpop.f32.mrb[0].mxu0
        %v773 = vadd.f32 0.0, %v772
        %v774 = vpop.f32.mrb[0].mxu0
        %v775 = vpop.f32.mrb[0].mxu0
        %v776 = vadd.f32 0.0, %v775
        %v777 = vpop.f32.mrb[0].mxu0
        %778 = vmatprep.mubr.bf16.mxu0 0
        %779 = vmatmul.mubr.bf16.gmra.mrb[0].mxu0 %v679
        %v780 = vpop.f32.mrb[0].mxu0
        %v781 = vadd.f32 0.0, %v780
        %v782 = vpop.f32.mrb[0].mxu0
        %v783 = vpop.f32.mrb[0].mxu0
        %v784 = vadd.f32 0.0, %v783
        %v785 = vpop.f32.mrb[0].mxu0
        %786 = vmatprep.mubr.bf16.mxu0 0
        %787 = vmatmul.mubr.bf16.gmra.mrb[0].mxu0 %v682
        %v788 = vpop.f32.mrb[0].mxu0
        %v789 = vadd.f32 0.0, %v788
        %v790 = vpop.f32.mrb[0].mxu0
        %v791 = vpop.f32.mrb[0].mxu0
        %v792 = vadd.f32 0.0, %v791
        %v793 = vpop.f32.mrb[0].mxu0
        %794 = vmatprep.mubr.bf16.mxu0 0
        %795 = vmatmul.mubr.bf16.gmra.mrb[0].mxu0 %v685
        %v796 = vpop.f32.mrb[0].mxu0
        %v797 = vadd.f32 0.0, %v796
        %v798 = vpop.f32.mrb[0].mxu0
        %v799 = vpop.f32.mrb[0].mxu0
        %v800 = vadd.f32 0.0, %v799
        %v801 = vpop.f32.mrb[0].mxu0
        %802 = vmatprep.mubr.bf16.mxu0 0
        %803 = vmatmul.mubr.bf16.gmra.mrb[0].mxu0 %v688
        %v804 = vpop.f32.mrb[0].mxu0
        %v805 = vadd.f32 0.0, %v804
        %v806 = vpop.f32.mrb[0].mxu0
        %v807 = vpop.f32.mrb[0].mxu0
        %v808 = vadd.f32 0.0, %v807
        %v809 = vpop.f32.mrb[0].mxu0
        %810 = vmatprep.mubr.bf16.mxu0 0
        %811 = vmatmul.mubr.bf16.gmra.mrb[0].mxu0 %v691
        %v812 = vpop.f32.mrb[0].mxu0
        %v813 = vadd.f32 0.0, %v812
        %v814 = vpop.f32.mrb[0].mxu0
        %v815 = vpop.f32.mrb[0].mxu0
        %v816 = vadd.f32 0.0, %v815
        %v817 = vpop.f32.mrb[0].mxu0
        %818 = vmatprep.mubr.bf16.mxu0 0
        %819 = vmatmul.mubr.bf16.gmra.mrb[0].mxu0 %v694
        %v820 = vpop.f32.mrb[0].mxu0
        %v821 = vadd.f32 0.0, %v820
        %v822 = vpop.f32.mrb[0].mxu0
        %v823 = vpop.f32.mrb[0].mxu0
        %v824 = vadd.f32 0.0, %v823
        %v825 = vpop.f32.mrb[0].mxu0
        %826 = vmatprep.mubr.bf16.mxu0 0
        %827 = vmatmul.mubr.bf16.gmra.mrb[0].mxu0 %v697
        %v828 = vpop.f32.mrb[0].mxu0
        %v829 = vadd.f32 0.0, %v828
        %v830 = vpop.f32.mrb[0].mxu0
        %v831 = vpop.f32.mrb[0].mxu0
        %v832 = vadd.f32 0.0, %v831
        %v833 = vpop.f32.mrb[0].mxu0
        %834 = vmatprep.mubr.bf16.mxu0 0
        %835 = vmatmul.mubr.bf16.gmra.mrb[0].mxu0 %v700
        %v836 = vpop.f32.mrb[0].mxu0
        %v837 = vadd.f32 0.0, %v836
        %v838 = vpop.f32.mrb[0].mxu0
        %v839 = vpop.f32.mrb[0].mxu0
        %v840 = vadd.f32 0.0, %v839
        %v841 = vpop.f32.mrb[0].mxu0
        %842 = vmatprep.mubr.bf16.mxu0 0
        %843 = vmatmul.mubr.bf16.gmra.mrb[0].mxu0 %v703
        %v844 = vpop.f32.mrb[0].mxu0
        %v845 = vadd.f32 0.0, %v844
        %v846 = vpop.f32.mrb[0].mxu0
        %v847 = vpop.f32.mrb[0].mxu0
        %v848 = vadd.f32 0.0, %v847
        %v849 = vpop.f32.mrb[0].mxu0
        %850 = vmatprep.mubr.bf16.mxu0 0
        %851 = vmatmul.mubr.bf16.gmra.mrb[0].mxu0 %v706
        %v852 = vpop.f32.mrb[0].mxu0
        %v853 = vadd.f32 0.0, %v852
        %v854 = vpop.f32.mrb[0].mxu0
        %v855 = vpop.f32.mrb[0].mxu0
        %v856 = vadd.f32 0.0, %v855
        %v857 = vpop.f32.mrb[0].mxu0
        %858 = vmatprep.mubr.bf16.mxu0 0
        %859 = vmatmul.mubr.bf16.gmra.mrb[0].mxu0 %v709
        %v860 = vpop.f32.mrb[0].mxu0
        %v861 = vadd.f32 0.0, %v860
        %v862 = vpop.f32.mrb[0].mxu0
        %v863 = vpop.f32.mrb[0].mxu0
        %v864 = vadd.f32 0.0, %v863
        %v865 = vpop.f32.mrb[0].mxu0
        %866 = vmatprep.mubr.bf16.mxu0 0
        %867 = vmatmul.mubr.bf16.gmra.mrb[0].mxu0 %v712
        %v868 = vpop.f32.mrb[0].mxu0
        %v869 = vadd.f32 0.0, %v868
        %v870 = vpop.f32.mrb[0].mxu0
        %v871 = vpop.f32.mrb[0].mxu0
        %v872 = vadd.f32 0.0, %v871
        %v873 = vpop.f32.mrb[0].mxu0
        %874 = vdwg.mxu0
        %v875 = vld [vmem:[#allocation4] sm:$0xff]
        %v876 = vld [vmem:[#allocation4 + $0x8] sm:$0xff]
        %877 = vmatprep.subr.mxu0 0.0
        %878 = vmatpush1.msra.mxu0 %v749
        %879 = vmatprep.subr.mxu0 0.0
        %880 = vmatpush1.msra.mxu0 %v752
        %881 = vmatprep.subr.mxu0 0.0
        %882 = vmatpush1.msra.mxu0 %v757
        %883 = vmatprep.subr.mxu0 0.0
        %884 = vmatpush1.msra.mxu0 %v760
        %885 = vmatprep.subr.mxu0 0.0
        %886 = vmatpush1.msra.mxu0 %v765
        %887 = vmatprep.subr.mxu0 0.0
        %888 = vmatpush1.msra.mxu0 %v768
        %889 = vmatprep.subr.mxu0 0.0
        %890 = vmatpush1.msra.mxu0 %v773
        %891 = vmatprep.subr.mxu0 0.0
        %892 = vmatpush1.msra.mxu0 %v776
        %893 = vmatprep.subr.mxu0 0.0
        %894 = vmatpush1.msra.mxu0 %v781
        %895 = vmatprep.subr.mxu0 0.0
        %896 = vmatpush1.msra.mxu0 %v784
        %897 = vmatprep.subr.mxu0 0.0
        %898 = vmatpush1.msra.mxu0 %v789
        %899 = vmatprep.subr.mxu0 0.0
        %900 = vmatpush1.msra.mxu0 %v792
        %901 = vmatprep.subr.mxu0 0.0
        %902 = vmatpush1.msra.mxu0 %v797
        %903 = vmatprep.subr.mxu0 0.0
        %904 = vmatpush1.msra.mxu0 %v800
        %905 = vmatprep.subr.mxu0 0.0
        %906 = vmatpush1.msra.mxu0 %v805
        %907 = vmatprep.subr.mxu0 0.0
        %908 = vmatpush1.msra.mxu0 %v808
        %909 = vmatprep.subr.mxu0 0.0
        %910 = vmatpush1.msra.mxu0 %v813
        %911 = vmatprep.subr.mxu0 0.0
        %912 = vmatpush1.msra.mxu0 %v816
        %913 = vmatprep.subr.mxu0 0.0
        %914 = vmatpush1.msra.mxu0 %v821
        %915 = vmatprep.subr.mxu0 0.0
        %916 = vmatpush1.msra.mxu0 %v824
        %917 = vmatprep.subr.mxu0 0.0
        %918 = vmatpush1.msra.mxu0 %v829
        %919 = vmatprep.subr.mxu0 0.0
        %920 = vmatpush1.msra.mxu0 %v832
        %921 = vmatprep.subr.mxu0 0.0
        %922 = vmatpush1.msra.mxu0 %v837
        %923 = vmatprep.subr.mxu0 0.0
        %924 = vmatpush1.msra.mxu0 %v840
        %925 = vmatprep.subr.mxu0 0.0
        %926 = vmatpush1.msra.mxu0 %v845
        %927 = vmatprep.subr.mxu0 0.0
        %928 = vmatpush1.msra.mxu0 %v848
        %929 = vmatprep.subr.mxu0 0.0
        %930 = vmatpush1.msra.mxu0 %v853
        %931 = vmatprep.subr.mxu0 0.0
        %932 = vmatpush1.msra.mxu0 %v856
        %933 = vmatprep.subr.mxu0 0.0
        %934 = vmatpush1.msra.mxu0 %v861
        %935 = vmatprep.subr.mxu0 0.0
        %936 = vmatpush1.msra.mxu0 %v864
        %937 = vmatprep.subr.mxu0 0.0
        %938 = vmatpush1.msra.mxu0 %v869
        %939 = vmatprep.subr.mxu0 0.0
        %940 = vmatpush1.msra.mxu0 %v872
        %941 = vmatprep.mubr.f32.mxu0 %v661
        %942 = vmatmul.mubr.f32.gmra.mrb[0].mxu0 %v660
        %v943 = vpop.f32.mrb[0].mxu0
        %v944 = vadd.f32 0.0, %v943
        %v945 = vpop.f32.mrb[0].mxu0
        %946 = vmatprep.mubr.f32.mxu0 %v663
        %947 = vmatmul.mubr.f32.gmra.mrb[0].mxu0 %v662
        %v948 = vpop.f32.mrb[0].mxu0
        %v949 = vadd.f32 0.0, %v948
        %v950 = vpop.f32.mrb[0].mxu0
        %951 = vdwg.mxu0
        %v952 = vadd.f32 %v875, %v944
        %v953 = vadd.f32 %v876, %v949
        %954 = vst [vmem:[#allocation4] sm:$0xff] %v952
        %955 = vst [vmem:[#allocation4 + $0x8] sm:$0xff] %v953
        %p956 = scmp.eq.s32.totalorder %s19, 2
        // Predicated region
        $region53: #{tpu_custom_call.1} parent=47 // pred_check
          %p957 = pneg %p956
        $region54: #{tpu_custom_call.1} parent=47 // pred_check_branch
          %959 = sbr.rel (%p957) target = $region56
        $region55: #{tpu_custom_call.1} parent=47 // pred_region
          %v960 = vld [vmem:[#allocation4] sm:$0xff]
          %v961 = vld [vmem:[#allocation4 + $0x8] sm:$0xff]
          %v962 = vadd.f32 %v960, 1e-06
          %v963 = vadd.f32 %v961, 1e-06
          %965 = vset.pattern.permute.xlu0 32
          %966 = vperm.xlu0 %965, %v962
          %v967 = vpop.permute.xlu0 %966
          %970 = vset.pattern.permute.xlu0 32
          %971 = vperm.xlu0 %970, %v963
          %v972 = vpop.permute.xlu0 %971
          %v974 = vrcp.pop %v967
          %v975 = vmul.f32 %v960, %v974
          %v976 = vrcp.pop %v972
          %v977 = vmul.f32 %v961, %v976
          %v978 = vld [vmem:[#allocation2] sm:$0xff]
          %v979 = vld [vmem:[#allocation2 + $0x8] sm:$0xff]
          %v980 = vadd.f32 %v978, %v975
          %v981 = vadd.f32 %v979, %v977
          %vm982 = vcmask 261120
          %v983 = vsel %vm982, %v980, 0.0
          %v984 = vsel %vm982, %v981, 0.0
          %v985 = vadd.f32 %v983, %v984
          %v986 = vrot.slane %v985, 4
          %v987 = vadd.f32 %v985, %v986
          %v988 = vrot.slane %v987, 2
          %v989 = vadd.f32 %v987, %v988
          %v990 = vrot.slane %v989, 1
          %v991 = vadd.f32 %v989, %v990
          %v992 = vrcp.pop 16.0
          %v993 = vmul.f32 %v991, %v992
          %v994 = vsub.f32 %v980, %v993
          %v995 = vsub.f32 %v981, %v993
          %v996 = vmul.f32 %v994, %v994
          %v997 = vmul.f32 %v995, %v995
          %v998 = vsel %vm982, %v996, 0.0
          %v999 = vsel %vm982, %v997, 0.0
          %v1000 = vadd.f32 %v998, %v999
          %v1001 = vrot.slane %v1000, 4
          %v1002 = vadd.f32 %v1000, %v1001
          %v1003 = vrot.slane %v1002, 2
          %v1004 = vadd.f32 %v1002, %v1003
          %v1005 = vrot.slane %v1004, 1
          %v1006 = vadd.f32 %v1004, %v1005
          %v1007 = vmul.f32 %v1006, %v992
          %v1008 = vadd.f32 %v1007, 1e-05
          %v1009 = vrsqrt.pop %v1008
          %v1010 = vmul.f32 %v994, %v1009
          %v1011 = vmul.f32 %v995, %v1009
          %v1012 = vld [vmem:[%s5] sm:$0x1]
          %v1014 = vlaneseq
          %v1015 = vshrl.u32 %v1014, 7
          %v1016 = vsub.s32 0, %v1015
          %v1017 = vrot.slane %v1012, %v1016
          %v1019 = vmul.f32 %v1010, %v1017
          %v1020 = vmul.f32 %v1011, %v1017
          %v1021 = vld [vmem:[%s6] sm:$0x1]
          %v1023 = vlaneseq
          %v1024 = vshrl.u32 %v1023, 7
          %v1025 = vsub.s32 0, %v1024
          %v1026 = vrot.slane %v1021, %v1025
          %v1028 = vadd.f32 %v1019, %v1026
          %v1029 = vadd.f32 %v1020, %v1026
          %v1030 = vld [vmem:[%s0] sm:$0xff]
          %v1031 = vld [vmem:[%s0 + $0x8] sm:$0xff]
          %v1032 = vmax.f32 %v1028, 0.0
          %v1033 = vmax.f32 %v1029, 0.0
          %v1034 = vadd.f32 %v1030, %v1032
          %v1035 = vadd.f32 %v1031, %v1033
          %1036 = vst.msk [vmem:[#allocation5] sm:$0xff] %vm982, %v1034
          %1037 = vst.msk [vmem:[#allocation5 + $0x8] sm:$0xff] %vm982, %v1035
        $region56: #{tpu_custom_call.1} parent=47 // pred_fallthru
          _
        // Predicated region
        $region57: #{tpu_custom_call.1} parent=47 // pred_check
          %p1038 = pneg %p194
        $region58: #{tpu_custom_call.1} parent=47 // pred_check_branch
          %1040 = sbr.rel (%p1038) target = $region60
        $region59: #{tpu_custom_call.1} parent=47 // pred_region
          %s1042 = ssub.s32 256, 256
          %1043 = vsyncadd [#allocation6], %s1042
          %s1044 = sshll.u32 [#allocation5], 4
          %s1045 = int_to_ptr.vmem [resolvable:$true] %s1044
          %1050 = dma.vmem_to_hbm [thread:$0]  %s1045, 256, %s7, [#allocation6], 128, 128, 8
        $region60: #{tpu_custom_call.1} parent=47 // pred_fallthru
          _
        // Predicated region
        $region61: #{tpu_custom_call.1} parent=47 // pred_check
          %p1051 = pneg %p194
        $region62: #{tpu_custom_call.1} parent=47 // pred_check_branch
          %1053 = sbr.rel (%p1051) target = $region64
        $region63: #{tpu_custom_call.1} parent=47 // pred_region
          %1054 = dma.done [#allocation6], 256
        $region64: #{tpu_custom_call.1} parent=47 // pred_fallthru
          _
      $region48: #{tpu_custom_call.1} parent=5 // pred_fallthru
        _
      %p1055 = scmp.le.s32.totalorder 2, %s14
      // Predicated region
      $region65: #{tpu_custom_call.1} parent=5 // pred_check
        %p1056 = pneg %p1055
      $region66: #{tpu_custom_call.1} parent=5 // pred_check_branch
        %1058 = sbr.rel (%p1056) target = $region68
      $region67: #{tpu_custom_call.1} parent=5 // pred_region
        %s1059 = ssub.s32 %s14, 2
      $region68: #{tpu_custom_call.1} parent=5 // pred_fallthru
        _
    $region6: #{tpu_custom_call.1} parent=1 // loop_footer
      %s18 = sadd.s32 1, %s14
    $region7: #{tpu_custom_call.1} parent=1 // loop_footer_branch
      %13 = sbr.rel target = $region3
    $region8: #{tpu_custom_call.1} parent=1 // loop_exit
      _
    %1060 = vsyncpa [#allocation6], 1
    %s1061 = scalar_lea.sflag [#allocation6], 1
    %1062 = vsyncpa %s1061, 1

</llo_original>
